<compile_context>
chip_gen: v7x
topology: tpu7x:2x2x1
jax: 0.10.0
libtpu: 0.0.40
codegen_flags: <defaults>
</compile_context>

<pallas_src>
import math

import jax
import jax.numpy as jnp
from jax.experimental import pallas as pl
from jax.experimental.pallas import tpu as pltpu

ALPHA = 16.0  # module-level `alpha` in the PyTorch spec


def _round_up(x, m):
    return (x + m - 1) // m * m


def _lora_kernel(x_ref, wt_ref, b_ref, xa_ref, bb_ref, o_ref, acc_ref):
    # x_ref : (tm, tk)  tile of hidden states (compute dtype)
    # wt_ref: (tk, tn)  tile of W^T (pre-transposed (K, N) layout, compute dtype)
    # b_ref : (1, tn)   bias tile (f32)
    # xa_ref: (tm, R)   precomputed x @ lora_A tile (f32); same block for all k, n
    # bb_ref: (R, tn)   lora_B tile (f32); same block for all k
    # o_ref : (tm, tn)  output tile
    # acc_ref: (tm, tn) resident f32 accumulator (across the K grid axis)
    k = pl.program_id(2)

    @pl.when(k == 0)
    def _():
        # Fold bias and the low-rank update into the accumulator init; this
        # (tm, R) @ (R, tn) matmul runs once per (m, n) output tile only.
        lora = jnp.dot(xa_ref[...], bb_ref[...],
                       preferred_element_type=jnp.float32)
        acc_ref[...] = b_ref[...] + ALPHA * lora

    # Main path: x @ W^T as a plain NN contraction against the pre-transposed
    # weight tile (no in-kernel transpose).
    acc_ref[...] += jnp.dot(x_ref[...], wt_ref[...],
                            preferred_element_type=jnp.float32)

    @pl.when(k == pl.num_programs(2) - 1)
    def _():
        o_ref[...] = acc_ref[...].astype(o_ref.dtype)


def make_lora_forward(w, b, lora_a, lora_b, *, compute_dtype=None,
                      tm=512, tn=1024, tk=512):
    """Prepare static weights once and return a jitted forward(hidden_states).

    w            : (out_features, in_features)  PyTorch nn.Linear weight
    b            : (out_features,)
    lora_a       : (in_features, rank)
    lora_b       : (rank, out_features)
    compute_dtype: optional MXU operand dtype for the main matmul (e.g.
                   jnp.bfloat16); accumulation is always f32 and the output
                   keeps hidden_states.dtype.
    tm/tn/tk     : tile sizes; tune per chip (e.g. v6e: 1024x2048x512 bf16,
                   v7x: 512x1024x512 bf16, v5e: 512x512x512 bf16).
    """
    N, K = w.shape                      # PyTorch layout: (out, in)
    R = lora_a.shape[1]
    cdt = jnp.dtype(w.dtype if compute_dtype is None else compute_dtype)

    tn_eff = min(tn, _round_up(N, 128))
    tk_eff = min(tk, _round_up(K, 128))
    Np = _round_up(N, tn_eff)
    Kp = _round_up(K, tk_eff)

    # ---- static weight prep: done once, outside the per-call path ----------
    wt_p = jnp.pad(jnp.asarray(w).T.astype(cdt), ((0, Kp - K), (0, Np - N)))
    b_p = jnp.pad(jnp.asarray(b).astype(jnp.float32).reshape(1, N),
                  ((0, 0), (0, Np - N)))
    a_f32 = jnp.asarray(lora_a).astype(jnp.float32)             # (K, R)
    bb_p = jnp.pad(jnp.asarray(lora_b).astype(jnp.float32),
                   ((0, 0), (0, Np - N)))                       # (R, Np)

    # Sublane packing for the compute dtype (f32:8, bf16:16, 8-bit:32).
    sub = {4: 8, 2: 16, 1: 32}[cdt.itemsize]

    @jax.jit
    def forward(hidden_states):
        orig_dtype = hidden_states.dtype
        B, S, H_in = hidden_states.shape
        assert H_in == K, "hidden size mismatch with prepared weights"
        M = B * S

        tm_eff = min(tm, _round_up(M, sub))
        Mp = _round_up(M, tm_eff)

        x2d = hidden_states.reshape(M, K)
        # Tiny low-rank projection (M,K)@(K,R); mem-bound, computed once per
        # call instead of once per (n, k) grid step on the MXU.
        xa = jnp.dot(x2d.astype(jnp.float32), a_f32,
                     preferred_element_type=jnp.float32)        # (M, R)

        # Only x-dependent tensors are cast/padded per call.
        x_p = jnp.pad(x2d.astype(cdt), ((0, Mp - M), (0, Kp - K)))
        xa_p = jnp.pad(xa, ((0, Mp - M), (0, 0)))

        grid = (Mp // tm_eff, Np // tn_eff, Kp // tk_eff)

        # VMEM working-set estimate: double-buffered inputs/outputs + f32 acc.
        # Request only what the chosen tiles need (with margin), never less
        # than the 32 MiB scoped default.
        r_lanes = _round_up(R, 128)                 # xa lane-pads R to 128
        est = 2 * (tm_eff * tk_eff + tk_eff * tn_eff) * cdt.itemsize
        est += 2 * (8 * tn_eff * 4 + tm_eff * r_lanes * 4
                    + _round_up(R, 8) * tn_eff * 4)
        est += 2 * tm_eff * tn_eff * jnp.dtype(orig_dtype).itemsize
        est += tm_eff * tn_eff * 4
        vmem_limit = int(max(est * 5 // 4, 32 * 1024 * 1024))

        out = pl.pallas_call(
            _lora_kernel,
            out_shape=jax.ShapeDtypeStruct((Mp, Np), orig_dtype),
            grid_spec=pltpu.PrefetchScalarGridSpec(
                num_scalar_prefetch=0,
                grid=grid,
                in_specs=[
                    pl.BlockSpec((tm_eff, tk_eff), lambda m, n, k: (m, k)),  # x
                    pl.BlockSpec((tk_eff, tn_eff), lambda m, n, k: (k, n)),  # W^T
                    pl.BlockSpec((1, tn_eff), lambda m, n, k: (0, n)),       # bias
                    pl.BlockSpec((tm_eff, R), lambda m, n, k: (m, 0)),       # x @ A
                    pl.BlockSpec((R, tn_eff), lambda m, n, k: (0, n)),       # lora_B
                ],
                out_specs=pl.BlockSpec((tm_eff, tn_eff), lambda m, n, k: (m, n)),
                scratch_shapes=[
                    pltpu.VMEM((tm_eff, tn_eff), jnp.float32),  # f32 accumulator
                ],
            ),
            compiler_params=pltpu.CompilerParams(
                dimension_semantics=("parallel", "parallel", "arbitrary"),
                vmem_limit_bytes=vmem_limit),
        )(x_p, wt_p, b_p, xa_p, bb_p)

        return out[:M, :N].reshape(B, S, N)

    return forward


if __name__ == "__main__":
    # Small shapes consistent with the module's forward:
    # hidden_states: (batch, seq, hidden) with a square hidden->hidden Linear.
    batch, seq, hidden = 2, 8, 32
    rank = 8
    key = jax.random.PRNGKey(0)
    kx, kw, kb, ka, kbb = jax.random.split(key, 5)

    x = jax.random.normal(kx, (batch, seq, hidden), dtype=jnp.float32)

    # original_layer = nn.Linear(hidden, hidden): weight (out, in), bias (out,)
    w = jax.random.normal(kw, (hidden, hidden), dtype=jnp.float32) * 0.05
    b = jax.random.normal(kb, (hidden,), dtype=jnp.float32) * 0.05

    # lora_A: kaiming_uniform_(a=sqrt(5)) on shape (in_features, rank)
    bound = math.sqrt(6.0 / ((1.0 + 5.0) * rank))
    lora_a = jax.random.uniform(ka, (hidden, rank), dtype=jnp.float32,
                                minval=-bound, maxval=bound)
    # lora_B is zeros in __init__; use small random values here so the LoRA
    # path is actually exercised (forward semantics are weight-agnostic).
    lora_b = jax.random.normal(kbb, (rank, hidden), dtype=jnp.float32) * 0.05

    # Pure-JAX reference of the PyTorch forward.
    ref = x @ w.T + b + ALPHA * ((x @ lora_a) @ lora_b)

    # f32 path (strict check).
    fwd_f32 = make_lora_forward(w, b, lora_a, lora_b)
    out = jax.block_until_ready(fwd_f32(x))
    assert out.shape == (batch, seq, hidden)
    assert jnp.allclose(out, ref, atol=1e-3, rtol=1e-3), "f32 mismatch vs reference"

    # bf16 operand path (full MXU rate on v5e/v6e/v7x; f32 accumulation).
    fwd_bf16 = make_lora_forward(w, b, lora_a, lora_b,
                                 compute_dtype=jnp.bfloat16)
    out_bf16 = jax.block_until_ready(fwd_bf16(x))
    assert jnp.allclose(out_bf16, ref, atol=1e-1, rtol=2e-2), "bf16 mismatch vs reference"

    print("KERNEL_OK")
</pallas_src>

<mosaic_0001>
module attributes {stable_mosaic.version = 11 : i64} {
  func.func @_lora_kernel(%arg0: i32, %arg1: i32, %arg2: i32, %arg3: memref<16x128xf32, #tpu.memory_space<vmem>>, %arg4: memref<128x128xf32, #tpu.memory_space<vmem>>, %arg5: memref<1x128xf32, #tpu.memory_space<vmem>>, %arg6: memref<16x8xf32, #tpu.memory_space<vmem>>, %arg7: memref<8x128xf32, #tpu.memory_space<vmem>>, %arg8: memref<16x128xf32, #tpu.memory_space<vmem>>, %arg9: memref<16x128xf32, #tpu.memory_space<vmem>>) attributes {dimension_semantics = [#tpu.dimension_semantics<parallel>, #tpu.dimension_semantics<parallel>, #tpu.dimension_semantics<arbitrary>], iteration_bounds = array<i64: 1, 1, 1>, scalar_prefetch = 0 : i64, scratch_operands = 1 : i64, tpu.core_type = #tpu.core_type<tc>, window_params = [{transform_indices = @transform_0, window_bounds = array<i64: 16, 128>}, {transform_indices = @transform_1, window_bounds = array<i64: 128, 128>}, {transform_indices = @transform_2, window_bounds = array<i64: 1, 128>}, {transform_indices = @transform_3, window_bounds = array<i64: 16, 8>}, {transform_indices = @transform_4, window_bounds = array<i64: 8, 128>}, {transform_indices = @transform_5, window_bounds = array<i64: 16, 128>}]} {
    %c0_i32 = arith.constant 0 : i32
    %0 = arith.cmpi eq, %arg2, %c0_i32 : i32
    %1 = arith.extui %0 : i1 to i32
    %c0_i32_0 = arith.constant 0 : i32
    %2 = arith.cmpi ne, %1, %c0_i32_0 : i32
    scf.if %2 {
      %c0_10 = arith.constant 0 : index
      %c0_11 = arith.constant 0 : index
      %12 = vector.load %arg6[%c0_10, %c0_11] : memref<16x8xf32, #tpu.memory_space<vmem>>, vector<16x8xf32>
      %c0_12 = arith.constant 0 : index
      %c0_13 = arith.constant 0 : index
      %13 = vector.load %arg7[%c0_12, %c0_13] : memref<8x128xf32, #tpu.memory_space<vmem>>, vector<8x128xf32>
      %cst_14 = arith.constant dense<0.000000e+00> : vector<16x128xf32>
      %14 = tpu.matmul %12, %13, %cst_14 {dimension_numbers = #tpu.dot_dimension_numbers<[1], [0], [0], [1], [0, 0, 1, 1], [], []>} : vector<16x8xf32>, vector<8x128xf32>, vector<16x128xf32> -> vector<16x128xf32>
      %c0_15 = arith.constant 0 : index
      %c0_16 = arith.constant 0 : index
      %15 = vector.load %arg5[%c0_15, %c0_16] : memref<1x128xf32, #tpu.memory_space<vmem>>, vector<1x128xf32>
      %cst_17 = arith.constant 1.600000e+01 : f32
      %16 = vector.broadcast %cst_17 : f32 to vector<16x128xf32>
      %17 = arith.mulf %16, %14 : vector<16x128xf32>
      %18 = vector.broadcast %15 : vector<1x128xf32> to vector<16x128xf32>
      %19 = arith.addf %18, %17 : vector<16x128xf32>
      %c0_18 = arith.constant 0 : index
      %c0_19 = arith.constant 0 : index
      %20 = vector.load %arg9[%c0_18, %c0_19] : memref<16x128xf32, #tpu.memory_space<vmem>>, vector<16x128xf32>
      tpu.vector_store %arg9[%c0_18, %c0_19], %19 {strides = array<i32>} : memref<16x128xf32, #tpu.memory_space<vmem>>, vector<16x128xf32>,
    } else {
    }
    %c0 = arith.constant 0 : index
    %c0_1 = arith.constant 0 : index
    %3 = vector.load %arg9[%c0, %c0_1] : memref<16x128xf32, #tpu.memory_space<vmem>>, vector<16x128xf32>
    %c0_2 = arith.constant 0 : index
    %c0_3 = arith.constant 0 : index
    %4 = vector.load %arg3[%c0_2, %c0_3] : memref<16x128xf32, #tpu.memory_space<vmem>>, vector<16x128xf32>
    %c0_4 = arith.constant 0 : index
    %c0_5 = arith.constant 0 : index
    %5 = vector.load %arg4[%c0_4, %c0_5] : memref<128x128xf32, #tpu.memory_space<vmem>>, vector<128x128xf32>
    %cst = arith.constant dense<0.000000e+00> : vector<16x128xf32>
    %6 = tpu.matmul %4, %5, %cst {dimension_numbers = #tpu.dot_dimension_numbers<[1], [0], [0], [1], [0, 0, 1, 1], [], []>} : vector<16x128xf32>, vector<128x128xf32>, vector<16x128xf32> -> vector<16x128xf32>
    %7 = arith.addf %3, %6 : vector<16x128xf32>
    %c0_6 = arith.constant 0 : index
    %c0_7 = arith.constant 0 : index
    %8 = vector.load %arg9[%c0_6, %c0_7] : memref<16x128xf32, #tpu.memory_space<vmem>>, vector<16x128xf32>
    tpu.vector_store %arg9[%c0_6, %c0_7], %7 {strides = array<i32>} : memref<16x128xf32, #tpu.memory_space<vmem>>, vector<16x128xf32>,
    %c0_i32_8 = arith.constant 0 : i32
    %9 = arith.cmpi eq, %arg2, %c0_i32_8 : i32
    %10 = arith.extui %9 : i1 to i32
    %c0_i32_9 = arith.constant 0 : i32
    %11 = arith.cmpi ne, %10, %c0_i32_9 : i32
    scf.if %11 {
      %c0_10 = arith.constant 0 : index
      %c0_11 = arith.constant 0 : index
      %12 = vector.load %arg9[%c0_10, %c0_11] : memref<16x128xf32, #tpu.memory_space<vmem>>, vector<16x128xf32>
      %c0_12 = arith.constant 0 : index
      %c0_13 = arith.constant 0 : index
      %13 = vector.load %arg8[%c0_12, %c0_13] : memref<16x128xf32, #tpu.memory_space<vmem>>, vector<16x128xf32>
      tpu.vector_store %arg8[%c0_12, %c0_13], %12 {strides = array<i32>} : memref<16x128xf32, #tpu.memory_space<vmem>>, vector<16x128xf32>,
    } else {
    }
    return
  }
  func.func @transform_0(%arg0: i32, %arg1: i32, %arg2: i32) -> (i32, i32) {
    %c0_i32 = arith.constant 0 : i32
    return %arg0, %arg2 : i32, i32
  }
  func.func @transform_1(%arg0: i32, %arg1: i32, %arg2: i32) -> (i32, i32) {
    %c0_i32 = arith.constant 0 : i32
    return %arg2, %arg1 : i32, i32
  }
  func.func @transform_2(%arg0: i32, %arg1: i32, %arg2: i32) -> (i32, i32) {
    %c0_i32 = arith.constant 0 : i32
    %c0_i32_0 = arith.constant 0 : i32
    return %c0_i32, %arg1 : i32, i32
  }
  func.func @transform_3(%arg0: i32, %arg1: i32, %arg2: i32) -> (i32, i32) {
    %c0_i32 = arith.constant 0 : i32
    %c0_i32_0 = arith.constant 0 : i32
    return %arg0, %c0_i32 : i32, i32
  }
  func.func @transform_4(%arg0: i32, %arg1: i32, %arg2: i32) -> (i32, i32) {
    %c0_i32 = arith.constant 0 : i32
    %c0_i32_0 = arith.constant 0 : i32
    return %c0_i32, %arg1 : i32, i32
  }
  func.func @transform_5(%arg0: i32, %arg1: i32, %arg2: i32) -> (i32, i32) {
    %c0_i32 = arith.constant 0 : i32
    return %arg0, %arg1 : i32, i32
  }
}

</mosaic_0001>

<llo_original>
// kernel: forward.1
$region0: #{forward.1}
  #allocation0 [shape = 'u32[]', space=smem, size = 0x4, offset = 0x4, fixed_abs, tag = 'smem constant byte address 0x4 - core index']
  #allocation1 [shape = 'u32[144,128]{1,0:T(1,128)}', space=vmem, size = 0x12000, scoped, tag = 'internal scratch']
  #allocation2 [shape = 'f32[16,128]{1,0:T(8,128)}', space=vmem, size = 0x2000, scoped, tag = 'scratch operand']
  %s0 = inlined_call_operand.vmem [shape: f32[16,128], index: 0, kind: input, shape index: {}]
  %s1 = inlined_call_operand.hbm [shape: f32[128,128], index: 1, kind: input, shape index: {}]
  %s2 = inlined_call_operand.vmem [shape: f32[1,128], index: 2, kind: input, shape index: {}]
  %s3 = inlined_call_operand.vmem [shape: f32[16,8], index: 3, kind: input, shape index: {}]
  %s4 = inlined_call_operand.vmem [shape: f32[8,128], index: 4, kind: input, shape index: {}]
  %s5 = inlined_call_operand.vmem [shape: f32[16,128], index: 5, kind: output, shape index: {}]
  %s6 = sld [smem:[#allocation0]]
  $region42: #{forward.1} parent=0
    _
  %s8 = ssub.s32 1, %s6
  %s9 = scalar_select 0, %s8, %s6
  $region1: #{forward.1} parent=0
    #allocation3 [shape = 'u8[65536]{0}', space=vmem, size = 0x10000, scoped, tag = 'input window, operand 1, single buffered']
    #allocation4 [shape = 's32[1]{0}', space=sflag, size = 0x4, scoped, tag = 'scoped memory for forward.1']
    %10 = vsyncpa [#allocation4], 0
    // Predicated region
    $region2: #{forward.1} parent=1 // pred_check
      _
    $region3: #{forward.1} parent=1 // pred_check_branch
      %12 = sbr.rel (0) target = $region5
    $region4: #{forward.1} parent=1 // pred_region
      _
    $region5: #{forward.1} parent=1 // pred_fallthru
      _
    // Predicated region
    $region6: #{forward.1} parent=1 // pred_check
      _
    $region7: #{forward.1} parent=1 // pred_check_branch
      %14 = sbr.rel (0) target = $region9
    $region8: #{forward.1} parent=1 // pred_region
      %s16 = ssub.s32 2048, 2048
      %17 = vsyncadd [#allocation4], %s16
      %s18 = sshll.u32 [#allocation3], 4
      %s19 = int_to_ptr.vmem [resolvable:$true] %s18
      %24 = dma.hbm_to_vmem [thread:$0]  %s1, 2048, %s19, [#allocation4], 128, 128, 8
    $region9: #{forward.1} parent=1 // pred_fallthru
      _
    // Predicated region
    $region10: #{forward.1} parent=1 // pred_check
      _
    $region11: #{forward.1} parent=1 // pred_check_branch
      %26 = sbr.rel (0) target = $region13
    $region12: #{forward.1} parent=1 // pred_region
      _
    $region13: #{forward.1} parent=1 // pred_fallthru
      _
    // Predicated region
    $region14: #{forward.1} parent=1 // pred_check
      _
    $region15: #{forward.1} parent=1 // pred_check_branch
      %28 = sbr.rel (0) target = $region17
    $region16: #{forward.1} parent=1 // pred_region
      _
    $region17: #{forward.1} parent=1 // pred_fallthru
      _
    // Predicated region
    $region18: #{forward.1} parent=1 // pred_check
      _
    $region19: #{forward.1} parent=1 // pred_check_branch
      %30 = sbr.rel (0) target = $region21
    $region20: #{forward.1} parent=1 // pred_region
      _
    $region21: #{forward.1} parent=1 // pred_fallthru
      _
    // Predicated region
    $region22: #{forward.1} parent=1 // pred_check
      _
    $region23: #{forward.1} parent=1 // pred_check_branch
      %32 = sbr.rel (0) target = $region25
    $region24: #{forward.1} parent=1 // pred_region
      %33 = dma.done [#allocation4], 2048
    $region25: #{forward.1} parent=1 // pred_fallthru
      _
    %p34 = scmp.eq.s32.totalorder 0, 0
    // Predicated region
    $region26: #{forward.1} parent=1 // pred_check
      %p35 = pneg %p34
    $region27: #{forward.1} parent=1 // pred_check_branch
      %37 = sbr.rel (%p35) target = $region29
    $region28: #{forward.1} parent=1 // pred_region
      %v38 = vld [vmem:[%s3] sm:$0xff]
      %v39 = vld [vmem:[%s3 + $0x8] sm:$0xff]
      %v40 = vld [vmem:[%s4] sm:$0xff]
      %vm41 = vcmask 64512
      %v43 = vsel %vm41, %v38, 0
      %v46 = vsel %vm41, %v39, 0
      %48 = vmatprep.subr.mxu0 0.0
      %49 = vmatpush1.msra.mxu0 %v40
      %50 = vmatprep.subr.mxu0 0.0
      %51 = vmatpush1.msra.mxu0 0.0
      %52 = vmatprep.subr.mxu0 0.0
      %53 = vmatpush1.msra.mxu0 0.0
      %54 = vmatprep.subr.mxu0 0.0
      %55 = vmatpush1.msra.mxu0 0.0
      %56 = vmatprep.subr.mxu0 0.0
      %57 = vmatpush1.msra.mxu0 0.0
      %58 = vmatprep.subr.mxu0 0.0
      %59 = vmatpush1.msra.mxu0 0.0
      %60 = vmatprep.subr.mxu0 0.0
      %61 = vmatpush1.msra.mxu0 0.0
      %62 = vmatprep.subr.mxu0 0.0
      %63 = vmatpush1.msra.mxu0 0.0
      %64 = vmatprep.subr.mxu0 0.0
      %65 = vmatpush1.msra.mxu0 0.0
      %66 = vmatprep.subr.mxu0 0.0
      %67 = vmatpush1.msra.mxu0 0.0
      %68 = vmatprep.subr.mxu0 0.0
      %69 = vmatpush1.msra.mxu0 0.0
      %70 = vmatprep.subr.mxu0 0.0
      %71 = vmatpush1.msra.mxu0 0.0
      %72 = vmatprep.subr.mxu0 0.0
      %73 = vmatpush1.msra.mxu0 0.0
      %74 = vmatprep.subr.mxu0 0.0
      %75 = vmatpush1.msra.mxu0 0.0
      %76 = vmatprep.subr.mxu0 0.0
      %77 = vmatpush1.msra.mxu0 0.0
      %78 = vmatprep.subr.mxu0 0.0
      %79 = vmatpush1.msra.mxu0 0.0
      %80 = vmatprep.subr.mxu0 0.0
      %81 = vmatpush1.msra.mxu0 0.0
      %82 = vmatprep.subr.mxu0 0.0
      %83 = vmatpush1.msra.mxu0 0.0
      %84 = vmatprep.subr.mxu0 0.0
      %85 = vmatpush1.msra.mxu0 0.0
      %86 = vmatprep.subr.mxu0 0.0
      %87 = vmatpush1.msra.mxu0 0.0
      %88 = vmatprep.subr.mxu0 0.0
      %89 = vmatpush1.msra.mxu0 0.0
      %90 = vmatprep.subr.mxu0 0.0
      %91 = vmatpush1.msra.mxu0 0.0
      %92 = vmatprep.subr.mxu0 0.0
      %93 = vmatpush1.msra.mxu0 0.0
      %94 = vmatprep.subr.mxu0 0.0
      %95 = vmatpush1.msra.mxu0 0.0
      %96 = vmatprep.subr.mxu0 0.0
      %97 = vmatpush1.msra.mxu0 0.0
      %98 = vmatprep.subr.mxu0 0.0
      %99 = vmatpush1.msra.mxu0 0.0
      %100 = vmatprep.subr.mxu0 0.0
      %101 = vmatpush1.msra.mxu0 0.0
      %102 = vmatprep.subr.mxu0 0.0
      %103 = vmatpush1.msra.mxu0 0.0
      %104 = vmatprep.subr.mxu0 0.0
      %105 = vmatpush1.msra.mxu0 0.0
      %106 = vmatprep.subr.mxu0 0.0
      %107 = vmatpush1.msra.mxu0 0.0
      %108 = vmatprep.subr.mxu0 0.0
      %109 = vmatpush1.msra.mxu0 0.0
      %110 = vmatprep.subr.mxu0 0.0
      %111 = vmatpush1.msra.mxu0 0.0
      %112 = vmatprep.mubr.f32.mxu0 0.0
      %113 = vmatmul.mubr.f32.gmra.mrb[0].mxu0 %v43
      %v114 = vpop.f32.mrb[0].mxu0
      %v115 = vadd.f32 0.0, %v114
      %v116 = vpop.f32.mrb[0].mxu0
      %117 = vmatprep.mubr.f32.mxu0 0.0
      %118 = vmatmul.mubr.f32.gmra.mrb[0].mxu0 %v46
      %v119 = vpop.f32.mrb[0].mxu0
      %v120 = vadd.f32 0.0, %v119
      %v121 = vpop.f32.mrb[0].mxu0
      %122 = vdwg.mxu0
      %v123 = vld [vmem:[%s2] sm:$0x1]
      %v124 = vmul.f32 %v115, 16.0
      %v125 = vmul.f32 %v120, 16.0
      %v127 = vlaneseq
      %v128 = vshrl.u32 %v127, 7
      %v129 = vsub.s32 0, %v128
      %v130 = vrot.slane %v123, %v129
      %v132 = vadd.f32 %v130, %v124
      %v133 = vadd.f32 %v130, %v125
      %134 = vst [vmem:[#allocation2] sm:$0xff] %v132
      %135 = vst [vmem:[#allocation2 + $0x8] sm:$0xff] %v133
    $region29: #{forward.1} parent=1 // pred_fallthru
      _
    %v136 = vld [vmem:[#allocation2] sm:$0xff]
    %v137 = vld [vmem:[#allocation2 + $0x8] sm:$0xff]
    %v138 = vld [vmem:[%s0] sm:$0xff]
    %v139 = vld [vmem:[%s0 + $0x8] sm:$0xff]
    %v140 = vld [vmem:[#allocation3] sm:$0xff]
    %v141 = vld [vmem:[#allocation3 + $0x8] sm:$0xff]
    %v142 = vld [vmem:[#allocation3 + $0x10] sm:$0xff]
    %v143 = vld [vmem:[#allocation3 + $0x18] sm:$0xff]
    %v144 = vld [vmem:[#allocation3 + $0x20] sm:$0xff]
    %v145 = vld [vmem:[#allocation3 + $0x28] sm:$0xff]
    %v146 = vld [vmem:[#allocation3 + $0x30] sm:$0xff]
    %v147 = vld [vmem:[#allocation3 + $0x38] sm:$0xff]
    %v148 = vld [vmem:[#allocation3 + $0x40] sm:$0xff]
    %v149 = vld [vmem:[#allocation3 + $0x48] sm:$0xff]
    %v150 = vld [vmem:[#allocation3 + $0x50] sm:$0xff]
    %v151 = vld [vmem:[#allocation3 + $0x58] sm:$0xff]
    %v152 = vld [vmem:[#allocation3 + $0x60] sm:$0xff]
    %v153 = vld [vmem:[#allocation3 + $0x68] sm:$0xff]
    %v154 = vld [vmem:[#allocation3 + $0x70] sm:$0xff]
    %v155 = vld [vmem:[#allocation3 + $0x78] sm:$0xff]
    %156 = vmatprep.subr.mxu0 0.0
    %157 = vmatpush1.msra.mxu0 %v140
    %158 = vmatprep.subr.mxu0 0.0
    %159 = vmatpush1.msra.mxu0 %v141
    %160 = vmatprep.subr.mxu0 0.0
    %161 = vmatpush1.msra.mxu0 %v142
    %162 = vmatprep.subr.mxu0 0.0
    %163 = vmatpush1.msra.mxu0 %v143
    %164 = vmatprep.subr.mxu0 0.0
    %165 = vmatpush1.msra.mxu0 %v144
    %166 = vmatprep.subr.mxu0 0.0
    %167 = vmatpush1.msra.mxu0 %v145
    %168 = vmatprep.subr.mxu0 0.0
    %169 = vmatpush1.msra.mxu0 %v146
    %170 = vmatprep.subr.mxu0 0.0
    %171 = vmatpush1.msra.mxu0 %v147
    %172 = vmatprep.subr.mxu0 0.0
    %173 = vmatpush1.msra.mxu0 %v148
    %174 = vmatprep.subr.mxu0 0.0
    %175 = vmatpush1.msra.mxu0 %v149
    %176 = vmatprep.subr.mxu0 0.0
    %177 = vmatpush1.msra.mxu0 %v150
    %178 = vmatprep.subr.mxu0 0.0
    %179 = vmatpush1.msra.mxu0 %v151
    %180 = vmatprep.subr.mxu0 0.0
    %181 = vmatpush1.msra.mxu0 %v152
    %182 = vmatprep.subr.mxu0 0.0
    %183 = vmatpush1.msra.mxu0 %v153
    %184 = vmatprep.subr.mxu0 0.0
    %185 = vmatpush1.msra.mxu0 %v154
    %186 = vmatprep.subr.mxu0 0.0
    %187 = vmatpush1.msra.mxu0 %v155
    %188 = vmatprep.subr.mxu0 0.0
    %189 = vmatpush1.msra.mxu0 0.0
    %190 = vmatprep.subr.mxu0 0.0
    %191 = vmatpush1.msra.mxu0 0.0
    %192 = vmatprep.subr.mxu0 0.0
    %193 = vmatpush1.msra.mxu0 0.0
    %194 = vmatprep.subr.mxu0 0.0
    %195 = vmatpush1.msra.mxu0 0.0
    %196 = vmatprep.subr.mxu0 0.0
    %197 = vmatpush1.msra.mxu0 0.0
    %198 = vmatprep.subr.mxu0 0.0
    %199 = vmatpush1.msra.mxu0 0.0
    %200 = vmatprep.subr.mxu0 0.0
    %201 = vmatpush1.msra.mxu0 0.0
    %202 = vmatprep.subr.mxu0 0.0
    %203 = vmatpush1.msra.mxu0 0.0
    %204 = vmatprep.subr.mxu0 0.0
    %205 = vmatpush1.msra.mxu0 0.0
    %206 = vmatprep.subr.mxu0 0.0
    %207 = vmatpush1.msra.mxu0 0.0
    %208 = vmatprep.subr.mxu0 0.0
    %209 = vmatpush1.msra.mxu0 0.0
    %210 = vmatprep.subr.mxu0 0.0
    %211 = vmatpush1.msra.mxu0 0.0
    %212 = vmatprep.subr.mxu0 0.0
    %213 = vmatpush1.msra.mxu0 0.0
    %214 = vmatprep.subr.mxu0 0.0
    %215 = vmatpush1.msra.mxu0 0.0
    %216 = vmatprep.subr.mxu0 0.0
    %217 = vmatpush1.msra.mxu0 0.0
    %218 = vmatprep.subr.mxu0 0.0
    %219 = vmatpush1.msra.mxu0 0.0
    %220 = vmatprep.mubr.f32.mxu0 0.0
    %221 = vmatmul.mubr.f32.gmra.mrb[0].mxu0 %v138
    %v222 = vpop.f32.mrb[0].mxu0
    %v223 = vadd.f32 0.0, %v222
    %v224 = vpop.f32.mrb[0].mxu0
    %225 = vmatprep.mubr.f32.mxu0 0.0
    %226 = vmatmul.mubr.f32.gmra.mrb[0].mxu0 %v139
    %v227 = vpop.f32.mrb[0].mxu0
    %v228 = vadd.f32 0.0, %v227
    %v229 = vpop.f32.mrb[0].mxu0
    %230 = vdwg.mxu0
    %v231 = vadd.f32 %v136, %v223
    %v232 = vadd.f32 %v137, %v228
    %233 = vst [vmem:[#allocation2] sm:$0xff] %v231
    %234 = vst [vmem:[#allocation2 + $0x8] sm:$0xff] %v232
    // Predicated region
    $region30: #{forward.1} parent=1 // pred_check
      %p235 = pneg %p34
    $region31: #{forward.1} parent=1 // pred_check_branch
      %237 = sbr.rel (%p235) target = $region33
    $region32: #{forward.1} parent=1 // pred_region
      %v238 = vld [vmem:[#allocation2] sm:$0xff]
      %v239 = vld [vmem:[#allocation2 + $0x8] sm:$0xff]
      %240 = vst [vmem:[%s5] sm:$0xff] %v238
      %241 = vst [vmem:[%s5 + $0x8] sm:$0xff] %v239
    $region33: #{forward.1} parent=1 // pred_fallthru
      _
    // Predicated region
    $region34: #{forward.1} parent=1 // pred_check
      _
    $region35: #{forward.1} parent=1 // pred_check_branch
      %243 = sbr.rel (0) target = $region37
    $region36: #{forward.1} parent=1 // pred_region
      _
    $region37: #{forward.1} parent=1 // pred_fallthru
      _
    // Predicated region
    $region38: #{forward.1} parent=1 // pred_check
      _
    $region39: #{forward.1} parent=1 // pred_check_branch
      %245 = sbr.rel (0) target = $region41
    $region40: #{forward.1} parent=1 // pred_region
      _
    $region41: #{forward.1} parent=1 // pred_fallthru
      _
    %246 = vsyncpa [#allocation4], 1

</llo_original>
